<compile_context>
chip_gen: v7x
topology: tpu7x:2x2x1
jax: 0.10.0
libtpu: 0.0.40
codegen_flags: <defaults>
</compile_context>

<pallas_src>
import jax
import jax.numpy as jnp
from jax import lax
from jax.experimental import pallas as pl
from jax.experimental.pallas import tpu as pltpu

EPS = 1e-5


def _round_up(x, m):
    return (x + m - 1) // m * m


# ----------------------------------------------------------------------------
# Fused kernel (closure over static shape parameters)
# ----------------------------------------------------------------------------
def _make_kernel(Nb, H, W, HW, Cm_p, Cio_p, mm_dtype):
    NHW = Nb * HW
    inv_cnt = 1.0 / float(NHW)              # BN stats over all N*H*W pixels

    def kernel(x_ref, mask_ref, w1_ref, w2_ref, w3_ref,
               g1_ref, b1_ref, g2_ref, b2_ref, g3_ref, b3_ref, out_ref):

        # training-mode BN (biased batch stats) fused into one affine + ReLU
        def bn_relu(z, g, b):
            s1 = jnp.sum(z, axis=1, keepdims=True)                  # (C, 1)
            s2 = jnp.sum(z * z, axis=1, keepdims=True)
            mean = s1 * inv_cnt
            var = jnp.maximum(s2 * inv_cnt - mean * mean, 0.0)
            scale = lax.rsqrt(var + EPS) * g
            shift = b - mean * scale
            return jnp.maximum(z * scale + shift, 0.0)

        x = x_ref[...]                                              # (Cio_p, NHW) f32

        # ---------------- conv1 (1x1): one dot over the whole batch slab ----
        z1 = jnp.dot(w1_ref[...], x.astype(mm_dtype),
                     preferred_element_type=jnp.float32)
        y1 = bn_relu(z1, g1_ref[...], b1_ref[...])                  # (Cm_p, NHW)

        # ---------------- conv2 (3x3, stride=1, pad=1) ----------------------
        # Neighbor (h+dy, w+dx) of lane p lives at lane p + dy*W + dx; pltpu.roll
        # brings it to lane p, the precomputed mask zeroes out-of-image sources
        # (including roll wrap across image boundaries of the merged batch axis).
        taps = []
        for ky in range(3):
            for kx in range(3):
                k = ky * 3 + kx
                off = (ky - 1) * W + (kx - 1)
                t = y1 if off == 0 else pltpu.roll(y1, shift=(-off) % NHW, axis=1)
                if off != 0:
                    t = t * mask_ref[k]                             # (1, NHW) 0/1 mask
                taps.append(t)
        patches = jnp.concatenate(taps, axis=0)                     # (9*Cm_p, NHW)
        z2 = jnp.dot(w2_ref[...], patches.astype(mm_dtype),         # K = 9*Cm_p
                     preferred_element_type=jnp.float32)
        y2 = bn_relu(z2, g2_ref[...], b2_ref[...])                  # (Cm_p, NHW)

        # ---------------- conv3 (1x1 expand) --------------------------------
        z3 = jnp.dot(w3_ref[...], y2.astype(mm_dtype),
                     preferred_element_type=jnp.float32)
        y3 = bn_relu(z3, g3_ref[...], b3_ref[...])                  # (Cio_p, NHW)

        # ---------------- residual add + final ReLU: one lane-dense store ---
        out_ref[...] = jnp.maximum(y3 + x, 0.0).astype(out_ref.dtype)

    return kernel


# ----------------------------------------------------------------------------
# DeconvBottleneck forward (stride=1, upsample=None)
# ----------------------------------------------------------------------------
def deconv_bottleneck_forward(x_nchw, params):
    Nb, Cin, H, W = x_nchw.shape
    C = params["w1_pt"].shape[0]                 # bottleneck width
    Cexp = params["w3_pt"].shape[0]              # out_channels * expansion
    assert Cexp == Cin, "identity shortcut requires in_channels == out*expansion"
    HW = H * W
    NHW = Nb * HW
    Cm_p = _round_up(C, 8)
    Cio_p = _round_up(Cin, 8)
    f32 = jnp.float32
    # bf16 MXU operands only once channel counts are realistic; f32 otherwise.
    mm_dtype = jnp.bfloat16 if max(C, Cin) >= 64 else f32

    # ---- activations: NCHW -> channel-major (C, N*H*W) slab ----------------
    x = jnp.transpose(x_nchw.astype(f32), (1, 0, 2, 3)).reshape(Cin, NHW)
    if Cio_p != Cin:
        x = jnp.pad(x, ((0, Cio_p - Cin), (0, 0)))

    # ---- per-tap boundary masks, precomputed in the wrapper ----------------
    pidx = jnp.arange(NHW, dtype=jnp.int32)
    pp = pidx % HW                               # per-image pixel index
    hh = pp // W
    ww = pp % W
    rows = []
    for ky in range(3):
        for kx in range(3):
            dy, dx = ky - 1, kx - 1
            cond = jnp.ones((NHW,), bool)
            if dy == -1:
                cond = cond & (hh >= 1)
            if dy == 1:
                cond = cond & (hh <= H - 2)
            if dx == -1:
                cond = cond & (ww >= 1)
            if dx == 1:
                cond = cond & (ww <= W - 2)
            rows.append(cond.astype(f32))
    masks = jnp.stack(rows).reshape(9, 1, NHW)

    # ---- weights: PyTorch layout -> matmul layout, zero-padded channels ----
    def pad2(w, r, c):
        return jnp.pad(w.astype(f32), ((0, r - w.shape[0]), (0, c - w.shape[1])))

    w1 = pad2(params["w1_pt"][:, :, 0, 0], Cm_p, Cio_p).astype(mm_dtype)     # (Cm_p, Cio_p)
    taps = jnp.transpose(params["w2_pt"], (2, 3, 0, 1)).reshape(9, C, C)     # [k, o, i]
    taps = jnp.pad(taps.astype(f32), ((0, 0), (0, Cm_p - C), (0, Cm_p - C)))
    w2 = jnp.transpose(taps, (1, 0, 2)).reshape(Cm_p, 9 * Cm_p).astype(mm_dtype)  # [o, k*Cm_p+i]
    w3 = pad2(params["w3_pt"][:, :, 0, 0], Cio_p, Cm_p).astype(mm_dtype)     # (Cio_p, Cm_p)

    def pad_vec(v, n):          # -> (n, 1); padded channels get gamma=beta=0
        v = v.reshape(-1).astype(f32)
        return jnp.pad(v, (0, n - v.shape[0])).reshape(n, 1)

    g1, b1 = pad_vec(params["g1"], Cm_p), pad_vec(params["b1"], Cm_p)
    g2, b2 = pad_vec(params["g2"], Cm_p), pad_vec(params["b2"], Cm_p)
    g3, b3 = pad_vec(params["g3"], Cio_p), pad_vec(params["b3"], Cio_p)

    kernel = _make_kernel(Nb, H, W, HW, Cm_p, Cio_p, mm_dtype)

    def full(shape):
        n = len(shape)
        return pl.BlockSpec(shape, lambda i, n=n: (0,) * n)

    out = pl.pallas_call(
        kernel,
        out_shape=jax.ShapeDtypeStruct((Cio_p, NHW), f32),
        grid=(1,),
        in_specs=[
            full((Cio_p, NHW)),                  # x (also the shortcut)
            full((9, 1, NHW)),                   # per-tap boundary masks
            full((Cm_p, Cio_p)),                 # w1
            full((Cm_p, 9 * Cm_p)),              # w2 (stacked taps)
            full((Cio_p, Cm_p)),                 # w3
            full((Cm_p, 1)), full((Cm_p, 1)),    # g1, b1
            full((Cm_p, 1)), full((Cm_p, 1)),    # g2, b2
            full((Cio_p, 1)), full((Cio_p, 1)),  # g3, b3
        ],
        out_specs=full((Cio_p, NHW)),
        compiler_params=pltpu.CompilerParams(
            dimension_semantics=("arbitrary",),
            vmem_limit_bytes=32 * 1024 * 1024),
    )(x, masks, w1, w2, w3, g1, b1, g2, b2, g3, b3)

    # ---- (Cio_p, N*H*W) -> NCHW; drop channel padding ----------------------
    out = jnp.transpose(out.reshape(Cio_p, Nb, H, W), (1, 0, 2, 3))
    if Cio_p != Cexp:
        out = out[:, :Cexp]
    return out


# ----------------------------------------------------------------------------
# Pure-JAX reference (sanity check)
# ----------------------------------------------------------------------------
def _bn_train(y, g, b):
    mean = jnp.mean(y, axis=0, keepdims=True)
    var = jnp.mean((y - mean) ** 2, axis=0, keepdims=True)
    return (y - mean) * jax.lax.rsqrt(var + EPS) * g + b


def reference_forward(x_nchw, params):
    Nb, Cin, H, W = x_nchw.shape
    C = params["w1_pt"].shape[0]
    x_nhwc = jnp.transpose(x_nchw, (0, 2, 3, 1))
    xf = x_nhwc.reshape(Nb * H * W, Cin)
    w1 = params["w1_pt"][:, :, 0, 0].T
    w2 = jnp.transpose(params["w2_pt"], (2, 3, 1, 0)).reshape(9 * C, C)
    w3 = params["w3_pt"][:, :, 0, 0].T
    y1 = jnp.maximum(_bn_train(xf @ w1, params["g1"], params["b1"]), 0.0)
    y1p = jnp.pad(y1.reshape(Nb, H, W, C), ((0, 0), (1, 1), (1, 1), (0, 0)))
    patches = jnp.concatenate(
        [y1p[:, ky:ky + H, kx:kx + W, :] for ky in range(3) for kx in range(3)],
        axis=-1,
    ).reshape(Nb * H * W, 9 * C)
    y2 = jnp.maximum(_bn_train(patches @ w2, params["g2"], params["b2"]), 0.0)
    y3 = jnp.maximum(_bn_train(y2 @ w3, params["g3"], params["b3"]), 0.0)
    out = jnp.maximum(y3 + xf, 0.0).reshape(Nb, H, W, -1)
    return jnp.transpose(out, (0, 3, 1, 2))


# ----------------------------------------------------------------------------
# Main
# ----------------------------------------------------------------------------
if __name__ == "__main__":
    out_channels = 4
    expansion = 2
    in_channels = out_channels * expansion  # 8 (identity shortcut requirement)
    Nb, H, W = 2, 16, 16

    key = jax.random.PRNGKey(0)
    ks = jax.random.split(key, 9)

    params = {
        "w1_pt": 0.1 * jax.random.normal(ks[0], (out_channels, in_channels, 1, 1), jnp.float32),
        "w2_pt": 0.1 * jax.random.normal(ks[1], (out_channels, out_channels, 3, 3), jnp.float32),
        "w3_pt": 0.1 * jax.random.normal(ks[2], (out_channels * expansion, out_channels, 1, 1), jnp.float32),
        "g1": 1.0 + 0.1 * jax.random.normal(ks[3], (out_channels,), jnp.float32),
        "b1": 0.1 * jax.random.normal(ks[4], (out_channels,), jnp.float32),
        "g2": 1.0 + 0.1 * jax.random.normal(ks[5], (out_channels,), jnp.float32),
        "b2": 0.1 * jax.random.normal(ks[6], (out_channels,), jnp.float32),
        "g3": 1.0 + 0.1 * jax.random.normal(ks[7], (out_channels * expansion,), jnp.float32),
        "b3": 0.1 * jax.random.normal(ks[8], (out_channels * expansion,), jnp.float32),
    }

    x = jax.random.normal(jax.random.PRNGKey(42), (Nb, in_channels, H, W), jnp.float32)

    out = jax.jit(deconv_bottleneck_forward)(x, params)
    out = jax.block_until_ready(out)

    ref = reference_forward(x, params)
    assert out.shape == (Nb, in_channels, H, W)
    assert jnp.allclose(out, ref, atol=1e-4, rtol=1e-4), "mismatch vs pure-JAX reference"

    print("KERNEL_OK")
</pallas_src>

<mosaic_0001>
module attributes {stable_mosaic.version = 11 : i64} {
  func.func @kernel(%arg0: i32, %arg1: memref<8x512xf32, #tpu.memory_space<vmem>>, %arg2: memref<9x1x512xf32, #tpu.memory_space<vmem>>, %arg3: memref<8x8xf32, #tpu.memory_space<vmem>>, %arg4: memref<8x72xf32, #tpu.memory_space<vmem>>, %arg5: memref<8x8xf32, #tpu.memory_space<vmem>>, %arg6: memref<8x1xf32, #tpu.memory_space<vmem>>, %arg7: memref<8x1xf32, #tpu.memory_space<vmem>>, %arg8: memref<8x1xf32, #tpu.memory_space<vmem>>, %arg9: memref<8x1xf32, #tpu.memory_space<vmem>>, %arg10: memref<8x1xf32, #tpu.memory_space<vmem>>, %arg11: memref<8x1xf32, #tpu.memory_space<vmem>>, %arg12: memref<8x512xf32, #tpu.memory_space<vmem>>) attributes {dimension_semantics = [#tpu.dimension_semantics<arbitrary>], iteration_bounds = array<i64: 1>, scalar_prefetch = 0 : i64, scratch_operands = 0 : i64, tpu.core_type = #tpu.core_type<tc>, window_params = [{pipeline_mode = #tpu.pipeline_mode<synchronous>, transform_indices = @transform_0, window_bounds = array<i64: 8, 512>}, {pipeline_mode = #tpu.pipeline_mode<synchronous>, transform_indices = @transform_1, window_bounds = array<i64: 9, 1, 512>}, {pipeline_mode = #tpu.pipeline_mode<synchronous>, transform_indices = @transform_2, window_bounds = array<i64: 8, 8>}, {pipeline_mode = #tpu.pipeline_mode<synchronous>, transform_indices = @transform_3, window_bounds = array<i64: 8, 72>}, {pipeline_mode = #tpu.pipeline_mode<synchronous>, transform_indices = @transform_4, window_bounds = array<i64: 8, 8>}, {pipeline_mode = #tpu.pipeline_mode<synchronous>, transform_indices = @transform_5, window_bounds = array<i64: 8, 1>}, {pipeline_mode = #tpu.pipeline_mode<synchronous>, transform_indices = @transform_6, window_bounds = array<i64: 8, 1>}, {pipeline_mode = #tpu.pipeline_mode<synchronous>, transform_indices = @transform_7, window_bounds = array<i64: 8, 1>}, {pipeline_mode = #tpu.pipeline_mode<synchronous>, transform_indices = @transform_8, window_bounds = array<i64: 8, 1>}, {pipeline_mode = #tpu.pipeline_mode<synchronous>, transform_indices = @transform_9, window_bounds = array<i64: 8, 1>}, {pipeline_mode = #tpu.pipeline_mode<synchronous>, transform_indices = @transform_10, window_bounds = array<i64: 8, 1>}, {pipeline_mode = #tpu.pipeline_mode<synchronous>, transform_indices = @transform_11, window_bounds = array<i64: 8, 512>}]} {
    %c0 = arith.constant 0 : index
    %c0_0 = arith.constant 0 : index
    %0 = vector.load %arg1[%c0, %c0_0] : memref<8x512xf32, #tpu.memory_space<vmem>>, vector<8x512xf32>
    %c0_1 = arith.constant 0 : index
    %c0_2 = arith.constant 0 : index
    %1 = vector.load %arg3[%c0_1, %c0_2] : memref<8x8xf32, #tpu.memory_space<vmem>>, vector<8x8xf32>
    %cst = arith.constant dense<0.000000e+00> : vector<8x512xf32>
    %2 = tpu.matmul %1, %0, %cst {dimension_numbers = #tpu.dot_dimension_numbers<[1], [0], [0], [1], [0, 0, 1, 1], [], []>} : vector<8x8xf32>, vector<8x512xf32>, vector<8x512xf32> -> vector<8x512xf32>
    %c0_3 = arith.constant 0 : index
    %c0_4 = arith.constant 0 : index
    %3 = vector.load %arg6[%c0_3, %c0_4] : memref<8x1xf32, #tpu.memory_space<vmem>>, vector<8x1xf32>
    %c0_5 = arith.constant 0 : index
    %c0_6 = arith.constant 0 : index
    %4 = vector.load %arg7[%c0_5, %c0_6] : memref<8x1xf32, #tpu.memory_space<vmem>>, vector<8x1xf32>
    %cst_7 = arith.constant dense<0.000000e+00> : vector<8xf32>
    %5 = vector.multi_reduction <add>, %2, %cst_7 [1] : vector<8x512xf32> to vector<8xf32>
    %6 = vector.shape_cast %5 : vector<8xf32> to vector<8x1xf32>
    %7 = arith.mulf %2, %2 : vector<8x512xf32>
    %cst_8 = arith.constant dense<0.000000e+00> : vector<8xf32>
    %8 = vector.multi_reduction <add>, %7, %cst_8 [1] : vector<8x512xf32> to vector<8xf32>
    %9 = vector.shape_cast %8 : vector<8xf32> to vector<8x1xf32>
    %cst_9 = arith.constant 0.001953125 : f32
    %10 = vector.broadcast %cst_9 : f32 to vector<8x1xf32>
    %11 = arith.mulf %6, %10 : vector<8x1xf32>
    %cst_10 = arith.constant 0.001953125 : f32
    %12 = vector.broadcast %cst_10 : f32 to vector<8x1xf32>
    %13 = arith.mulf %9, %12 : vector<8x1xf32>
    %14 = arith.mulf %11, %11 : vector<8x1xf32>
    %15 = arith.subf %13, %14 : vector<8x1xf32>
    %cst_11 = arith.constant 0.000000e+00 : f32
    %16 = vector.broadcast %cst_11 : f32 to vector<8x1xf32>
    %17 = arith.maximumf %15, %16 : vector<8x1xf32>
    %cst_12 = arith.constant 9.99999974E-6 : f32
    %18 = vector.broadcast %cst_12 : f32 to vector<8x1xf32>
    %19 = arith.addf %17, %18 : vector<8x1xf32>
    %20 = math.rsqrt %19 : vector<8x1xf32>
    %21 = arith.mulf %20, %3 : vector<8x1xf32>
    %22 = arith.mulf %11, %21 : vector<8x1xf32>
    %23 = arith.subf %4, %22 : vector<8x1xf32>
    %24 = vector.broadcast %21 : vector<8x1xf32> to vector<8x512xf32>
    %25 = arith.mulf %2, %24 : vector<8x512xf32>
    %26 = vector.broadcast %23 : vector<8x1xf32> to vector<8x512xf32>
    %27 = arith.addf %25, %26 : vector<8x512xf32>
    %cst_13 = arith.constant 0.000000e+00 : f32
    %28 = vector.broadcast %cst_13 : f32 to vector<8x512xf32>
    %29 = arith.maximumf %27, %28 : vector<8x512xf32>
    %c17_i32 = arith.constant 17 : i32
    %30 = tpu.dynamic_rotate %29 by %c17_i32 dim 1 : vector<8x512xf32>, i32 -> vector<8x512xf32>
    %c0_14 = arith.constant 0 : index
    %c0_15 = arith.constant 0 : index
    %c0_16 = arith.constant 0 : index
    %31 = vector.load %arg2[%c0_14, %c0_15, %c0_16] : memref<9x1x512xf32, #tpu.memory_space<vmem>>, vector<1x1x512xf32>
    %32 = vector.shape_cast %31 : vector<1x1x512xf32> to vector<1x512xf32>
    %33 = vector.broadcast %32 : vector<1x512xf32> to vector<8x512xf32>
    %34 = arith.mulf %30, %33 : vector<8x512xf32>
    %c16_i32 = arith.constant 16 : i32
    %35 = tpu.dynamic_rotate %29 by %c16_i32 dim 1 : vector<8x512xf32>, i32 -> vector<8x512xf32>
    %c1 = arith.constant 1 : index
    %c0_17 = arith.constant 0 : index
    %c0_18 = arith.constant 0 : index
    %36 = vector.load %arg2[%c1, %c0_17, %c0_18] : memref<9x1x512xf32, #tpu.memory_space<vmem>>, vector<1x1x512xf32>
    %37 = vector.shape_cast %36 : vector<1x1x512xf32> to vector<1x512xf32>
    %38 = vector.broadcast %37 : vector<1x512xf32> to vector<8x512xf32>
    %39 = arith.mulf %35, %38 : vector<8x512xf32>
    %c15_i32 = arith.constant 15 : i32
    %40 = tpu.dynamic_rotate %29 by %c15_i32 dim 1 : vector<8x512xf32>, i32 -> vector<8x512xf32>
    %c2 = arith.constant 2 : index
    %c0_19 = arith.constant 0 : index
    %c0_20 = arith.constant 0 : index
    %41 = vector.load %arg2[%c2, %c0_19, %c0_20] : memref<9x1x512xf32, #tpu.memory_space<vmem>>, vector<1x1x512xf32>
    %42 = vector.shape_cast %41 : vector<1x1x512xf32> to vector<1x512xf32>
    %43 = vector.broadcast %42 : vector<1x512xf32> to vector<8x512xf32>
    %44 = arith.mulf %40, %43 : vector<8x512xf32>
    %c1_i32 = arith.constant 1 : i32
    %45 = tpu.dynamic_rotate %29 by %c1_i32 dim 1 : vector<8x512xf32>, i32 -> vector<8x512xf32>
    %c3 = arith.constant 3 : index
    %c0_21 = arith.constant 0 : index
    %c0_22 = arith.constant 0 : index
    %46 = vector.load %arg2[%c3, %c0_21, %c0_22] : memref<9x1x512xf32, #tpu.memory_space<vmem>>, vector<1x1x512xf32>
    %47 = vector.shape_cast %46 : vector<1x1x512xf32> to vector<1x512xf32>
    %48 = vector.broadcast %47 : vector<1x512xf32> to vector<8x512xf32>
    %49 = arith.mulf %45, %48 : vector<8x512xf32>
    %c511_i32 = arith.constant 511 : i32
    %50 = tpu.dynamic_rotate %29 by %c511_i32 dim 1 : vector<8x512xf32>, i32 -> vector<8x512xf32>
    %c5 = arith.constant 5 : index
    %c0_23 = arith.constant 0 : index
    %c0_24 = arith.constant 0 : index
    %51 = vector.load %arg2[%c5, %c0_23, %c0_24] : memref<9x1x512xf32, #tpu.memory_space<vmem>>, vector<1x1x512xf32>
    %52 = vector.shape_cast %51 : vector<1x1x512xf32> to vector<1x512xf32>
    %53 = vector.broadcast %52 : vector<1x512xf32> to vector<8x512xf32>
    %54 = arith.mulf %50, %53 : vector<8x512xf32>
    %c497_i32 = arith.constant 497 : i32
    %55 = tpu.dynamic_rotate %29 by %c497_i32 dim 1 : vector<8x512xf32>, i32 -> vector<8x512xf32>
    %c6 = arith.constant 6 : index
    %c0_25 = arith.constant 0 : index
    %c0_26 = arith.constant 0 : index
    %56 = vector.load %arg2[%c6, %c0_25, %c0_26] : memref<9x1x512xf32, #tpu.memory_space<vmem>>, vector<1x1x512xf32>
    %57 = vector.shape_cast %56 : vector<1x1x512xf32> to vector<1x512xf32>
    %58 = vector.broadcast %57 : vector<1x512xf32> to vector<8x512xf32>
    %59 = arith.mulf %55, %58 : vector<8x512xf32>
    %c496_i32 = arith.constant 496 : i32
    %60 = tpu.dynamic_rotate %29 by %c496_i32 dim 1 : vector<8x512xf32>, i32 -> vector<8x512xf32>
    %c7 = arith.constant 7 : index
    %c0_27 = arith.constant 0 : index
    %c0_28 = arith.constant 0 : index
    %61 = vector.load %arg2[%c7, %c0_27, %c0_28] : memref<9x1x512xf32, #tpu.memory_space<vmem>>, vector<1x1x512xf32>
    %62 = vector.shape_cast %61 : vector<1x1x512xf32> to vector<1x512xf32>
    %63 = vector.broadcast %62 : vector<1x512xf32> to vector<8x512xf32>
    %64 = arith.mulf %60, %63 : vector<8x512xf32>
    %c495_i32 = arith.constant 495 : i32
    %65 = tpu.dynamic_rotate %29 by %c495_i32 dim 1 : vector<8x512xf32>, i32 -> vector<8x512xf32>
    %c8 = arith.constant 8 : index
    %c0_29 = arith.constant 0 : index
    %c0_30 = arith.constant 0 : index
    %66 = vector.load %arg2[%c8, %c0_29, %c0_30] : memref<9x1x512xf32, #tpu.memory_space<vmem>>, vector<1x1x512xf32>
    %67 = vector.shape_cast %66 : vector<1x1x512xf32> to vector<1x512xf32>
    %68 = vector.broadcast %67 : vector<1x512xf32> to vector<8x512xf32>
    %69 = arith.mulf %65, %68 : vector<8x512xf32>
    %70 = tpu.concatenate %34, %39, %44, %49, %29, %54, %59, %64, %69 in 0 : vector<8x512xf32>, vector<8x512xf32>, vector<8x512xf32>, vector<8x512xf32>, vector<8x512xf32>, vector<8x512xf32>, vector<8x512xf32>, vector<8x512xf32>, vector<8x512xf32> -> vector<72x512xf32>
    %c0_31 = arith.constant 0 : index
    %c0_32 = arith.constant 0 : index
    %71 = vector.load %arg4[%c0_31, %c0_32] : memref<8x72xf32, #tpu.memory_space<vmem>>, vector<8x72xf32>
    %cst_33 = arith.constant dense<0.000000e+00> : vector<8x512xf32>
    %72 = tpu.matmul %71, %70, %cst_33 {dimension_numbers = #tpu.dot_dimension_numbers<[1], [0], [0], [1], [0, 0, 1, 1], [], []>} : vector<8x72xf32>, vector<72x512xf32>, vector<8x512xf32> -> vector<8x512xf32>
    %c0_34 = arith.constant 0 : index
    %c0_35 = arith.constant 0 : index
    %73 = vector.load %arg8[%c0_34, %c0_35] : memref<8x1xf32, #tpu.memory_space<vmem>>, vector<8x1xf32>
    %c0_36 = arith.constant 0 : index
    %c0_37 = arith.constant 0 : index
    %74 = vector.load %arg9[%c0_36, %c0_37] : memref<8x1xf32, #tpu.memory_space<vmem>>, vector<8x1xf32>
    %cst_38 = arith.constant dense<0.000000e+00> : vector<8xf32>
    %75 = vector.multi_reduction <add>, %72, %cst_38 [1] : vector<8x512xf32> to vector<8xf32>
    %76 = vector.shape_cast %75 : vector<8xf32> to vector<8x1xf32>
    %77 = arith.mulf %72, %72 : vector<8x512xf32>
    %cst_39 = arith.constant dense<0.000000e+00> : vector<8xf32>
    %78 = vector.multi_reduction <add>, %77, %cst_39 [1] : vector<8x512xf32> to vector<8xf32>
    %79 = vector.shape_cast %78 : vector<8xf32> to vector<8x1xf32>
    %cst_40 = arith.constant 0.001953125 : f32
    %80 = vector.broadcast %cst_40 : f32 to vector<8x1xf32>
    %81 = arith.mulf %76, %80 : vector<8x1xf32>
    %cst_41 = arith.constant 0.001953125 : f32
    %82 = vector.broadcast %cst_41 : f32 to vector<8x1xf32>
    %83 = arith.mulf %79, %82 : vector<8x1xf32>
    %84 = arith.mulf %81, %81 : vector<8x1xf32>
    %85 = arith.subf %83, %84 : vector<8x1xf32>
    %cst_42 = arith.constant 0.000000e+00 : f32
    %86 = vector.broadcast %cst_42 : f32 to vector<8x1xf32>
    %87 = arith.maximumf %85, %86 : vector<8x1xf32>
    %cst_43 = arith.constant 9.99999974E-6 : f32
    %88 = vector.broadcast %cst_43 : f32 to vector<8x1xf32>
    %89 = arith.addf %87, %88 : vector<8x1xf32>
    %90 = math.rsqrt %89 : vector<8x1xf32>
    %91 = arith.mulf %90, %73 : vector<8x1xf32>
    %92 = arith.mulf %81, %91 : vector<8x1xf32>
    %93 = arith.subf %74, %92 : vector<8x1xf32>
    %94 = vector.broadcast %91 : vector<8x1xf32> to vector<8x512xf32>
    %95 = arith.mulf %72, %94 : vector<8x512xf32>
    %96 = vector.broadcast %93 : vector<8x1xf32> to vector<8x512xf32>
    %97 = arith.addf %95, %96 : vector<8x512xf32>
    %cst_44 = arith.constant 0.000000e+00 : f32
    %98 = vector.broadcast %cst_44 : f32 to vector<8x512xf32>
    %99 = arith.maximumf %97, %98 : vector<8x512xf32>
    %c0_45 = arith.constant 0 : index
    %c0_46 = arith.constant 0 : index
    %100 = vector.load %arg5[%c0_45, %c0_46] : memref<8x8xf32, #tpu.memory_space<vmem>>, vector<8x8xf32>
    %cst_47 = arith.constant dense<0.000000e+00> : vector<8x512xf32>
    %101 = tpu.matmul %100, %99, %cst_47 {dimension_numbers = #tpu.dot_dimension_numbers<[1], [0], [0], [1], [0, 0, 1, 1], [], []>} : vector<8x8xf32>, vector<8x512xf32>, vector<8x512xf32> -> vector<8x512xf32>
    %c0_48 = arith.constant 0 : index
    %c0_49 = arith.constant 0 : index
    %102 = vector.load %arg10[%c0_48, %c0_49] : memref<8x1xf32, #tpu.memory_space<vmem>>, vector<8x1xf32>
    %c0_50 = arith.constant 0 : index
    %c0_51 = arith.constant 0 : index
    %103 = vector.load %arg11[%c0_50, %c0_51] : memref<8x1xf32, #tpu.memory_space<vmem>>, vector<8x1xf32>
    %cst_52 = arith.constant dense<0.000000e+00> : vector<8xf32>
    %104 = vector.multi_reduction <add>, %101, %cst_52 [1] : vector<8x512xf32> to vector<8xf32>
    %105 = vector.shape_cast %104 : vector<8xf32> to vector<8x1xf32>
    %106 = arith.mulf %101, %101 : vector<8x512xf32>
    %cst_53 = arith.constant dense<0.000000e+00> : vector<8xf32>
    %107 = vector.multi_reduction <add>, %106, %cst_53 [1] : vector<8x512xf32> to vector<8xf32>
    %108 = vector.shape_cast %107 : vector<8xf32> to vector<8x1xf32>
    %cst_54 = arith.constant 0.001953125 : f32
    %109 = vector.broadcast %cst_54 : f32 to vector<8x1xf32>
    %110 = arith.mulf %105, %109 : vector<8x1xf32>
    %cst_55 = arith.constant 0.001953125 : f32
    %111 = vector.broadcast %cst_55 : f32 to vector<8x1xf32>
    %112 = arith.mulf %108, %111 : vector<8x1xf32>
    %113 = arith.mulf %110, %110 : vector<8x1xf32>
    %114 = arith.subf %112, %113 : vector<8x1xf32>
    %cst_56 = arith.constant 0.000000e+00 : f32
    %115 = vector.broadcast %cst_56 : f32 to vector<8x1xf32>
    %116 = arith.maximumf %114, %115 : vector<8x1xf32>
    %cst_57 = arith.constant 9.99999974E-6 : f32
    %117 = vector.broadcast %cst_57 : f32 to vector<8x1xf32>
    %118 = arith.addf %116, %117 : vector<8x1xf32>
    %119 = math.rsqrt %118 : vector<8x1xf32>
    %120 = arith.mulf %119, %102 : vector<8x1xf32>
    %121 = arith.mulf %110, %120 : vector<8x1xf32>
    %122 = arith.subf %103, %121 : vector<8x1xf32>
    %123 = vector.broadcast %120 : vector<8x1xf32> to vector<8x512xf32>
    %124 = arith.mulf %101, %123 : vector<8x512xf32>
    %125 = vector.broadcast %122 : vector<8x1xf32> to vector<8x512xf32>
    %126 = arith.addf %124, %125 : vector<8x512xf32>
    %cst_58 = arith.constant 0.000000e+00 : f32
    %127 = vector.broadcast %cst_58 : f32 to vector<8x512xf32>
    %128 = arith.maximumf %126, %127 : vector<8x512xf32>
    %129 = arith.addf %128, %0 : vector<8x512xf32>
    %cst_59 = arith.constant 0.000000e+00 : f32
    %130 = vector.broadcast %cst_59 : f32 to vector<8x512xf32>
    %131 = arith.maximumf %129, %130 : vector<8x512xf32>
    %c0_60 = arith.constant 0 : index
    %c0_61 = arith.constant 0 : index
    %132 = vector.load %arg12[%c0_60, %c0_61] : memref<8x512xf32, #tpu.memory_space<vmem>>, vector<8x512xf32>
    tpu.vector_store %arg12[%c0_60, %c0_61], %131 {strides = array<i32>} : memref<8x512xf32, #tpu.memory_space<vmem>>, vector<8x512xf32>,
    return
  }
  func.func @transform_0(%arg0: i32) -> (i32, i32) {
    %c0_i32 = arith.constant 0 : i32
    %c0_i32_0 = arith.constant 0 : i32
    %c0_i32_1 = arith.constant 0 : i32
    return %c0_i32, %c0_i32_0 : i32, i32
  }
  func.func @transform_1(%arg0: i32) -> (i32, i32, i32) {
    %c0_i32 = arith.constant 0 : i32
    %c0_i32_0 = arith.constant 0 : i32
    %c0_i32_1 = arith.constant 0 : i32
    %c0_i32_2 = arith.constant 0 : i32
    return %c0_i32, %c0_i32_0, %c0_i32_1 : i32, i32, i32
  }
  func.func @transform_2(%arg0: i32) -> (i32, i32) {
    %c0_i32 = arith.constant 0 : i32
    %c0_i32_0 = arith.constant 0 : i32
    %c0_i32_1 = arith.constant 0 : i32
    return %c0_i32, %c0_i32_0 : i32, i32
  }
  func.func @transform_3(%arg0: i32) -> (i32, i32) {
    %c0_i32 = arith.constant 0 : i32
    %c0_i32_0 = arith.constant 0 : i32
    %c0_i32_1 = arith.constant 0 : i32
    return %c0_i32, %c0_i32_0 : i32, i32
  }
  func.func @transform_4(%arg0: i32) -> (i32, i32) {
    %c0_i32 = arith.constant 0 : i32
    %c0_i32_0 = arith.constant 0 : i32
    %c0_i32_1 = arith.constant 0 : i32
    return %c0_i32, %c0_i32_0 : i32, i32
  }
  func.func @transform_5(%arg0: i32) -> (i32, i32) {
    %c0_i32 = arith.constant 0 : i32
    %c0_i32_0 = arith.constant 0 : i32
    %c0_i32_1 = arith.constant 0 : i32
    return %c0_i32, %c0_i32_0 : i32, i32
  }
  func.func @transform_6(%arg0: i32) -> (i32, i32) {
    %c0_i32 = arith.constant 0 : i32
    %c0_i32_0 = arith.constant 0 : i32
    %c0_i32_1 = arith.constant 0 : i32
    return %c0_i32, %c0_i32_0 : i32, i32
  }
  func.func @transform_7(%arg0: i32) -> (i32, i32) {
    %c0_i32 = arith.constant 0 : i32
    %c0_i32_0 = arith.constant 0 : i32
    %c0_i32_1 = arith.constant 0 : i32
    return %c0_i32, %c0_i32_0 : i32, i32
  }
  func.func @transform_8(%arg0: i32) -> (i32, i32) {
    %c0_i32 = arith.constant 0 : i32
    %c0_i32_0 = arith.constant 0 : i32
    %c0_i32_1 = arith.constant 0 : i32
    return %c0_i32, %c0_i32_0 : i32, i32
  }
  func.func @transform_9(%arg0: i32) -> (i32, i32) {
    %c0_i32 = arith.constant 0 : i32
    %c0_i32_0 = arith.constant 0 : i32
    %c0_i32_1 = arith.constant 0 : i32
    return %c0_i32, %c0_i32_0 : i32, i32
  }
  func.func @transform_10(%arg0: i32) -> (i32, i32) {
    %c0_i32 = arith.constant 0 : i32
    %c0_i32_0 = arith.constant 0 : i32
    %c0_i32_1 = arith.constant 0 : i32
    return %c0_i32, %c0_i32_0 : i32, i32
  }
  func.func @transform_11(%arg0: i32) -> (i32, i32) {
    %c0_i32 = arith.constant 0 : i32
    %c0_i32_0 = arith.constant 0 : i32
    %c0_i32_1 = arith.constant 0 : i32
    return %c0_i32, %c0_i32_0 : i32, i32
  }
}

</mosaic_0001>

<llo_original>
// kernel: deconv_bottleneck_forward.1
$region0: #{deconv_bottleneck_forward.1}
  #allocation0 [shape = 'u32[]', space=smem, size = 0x4, offset = 0x4, fixed_abs, tag = 'smem constant byte address 0x4 - core index']
  #allocation1 [shape = 'u32[144,128]{1,0:T(1,128)}', space=vmem, size = 0x12000, scoped, tag = 'internal scratch']
  %s0 = inlined_call_operand.vmem [shape: f32[8,512], index: 0, kind: input, shape index: {}]
  %s1 = inlined_call_operand.vmem [shape: f32[9,1,512], index: 1, kind: input, shape index: {}]
  %s2 = inlined_call_operand.vmem [shape: f32[8,8], index: 2, kind: input, shape index: {}]
  %s3 = inlined_call_operand.vmem [shape: f32[8,72], index: 3, kind: input, shape index: {}]
  %s4 = inlined_call_operand.vmem [shape: f32[8,8], index: 4, kind: input, shape index: {}]
  %s5 = inlined_call_operand.vmem [shape: f32[8,1], index: 5, kind: input, shape index: {}]
  %s6 = inlined_call_operand.vmem [shape: f32[8,1], index: 6, kind: input, shape index: {}]
  %s7 = inlined_call_operand.vmem [shape: f32[8,1], index: 7, kind: input, shape index: {}]
  %s8 = inlined_call_operand.vmem [shape: f32[8,1], index: 8, kind: input, shape index: {}]
  %s9 = inlined_call_operand.vmem [shape: f32[8,1], index: 9, kind: input, shape index: {}]
  %s10 = inlined_call_operand.vmem [shape: f32[8,1], index: 10, kind: input, shape index: {}]
  %s11 = inlined_call_operand.vmem [shape: f32[8,512], index: 11, kind: output, shape index: {}]
  %s12 = sld [smem:[#allocation0]]
  $region54: #{deconv_bottleneck_forward.1} parent=0
    _
  %s14 = ssub.s32 1, %s12
  %s15 = scalar_select 0, %s14, %s12
  // Predicated region
  $region2: #{deconv_bottleneck_forward.1} parent=0 // pred_check
    _
  $region3: #{deconv_bottleneck_forward.1} parent=0 // pred_check_branch
    %17 = sbr.rel (0) target = $region5
  $region4: #{deconv_bottleneck_forward.1} parent=0 // pred_region
    _
  $region5: #{deconv_bottleneck_forward.1} parent=0 // pred_fallthru
    _
  // Predicated region
  $region6: #{deconv_bottleneck_forward.1} parent=0 // pred_check
    _
  $region7: #{deconv_bottleneck_forward.1} parent=0 // pred_check_branch
    %19 = sbr.rel (0) target = $region9
  $region8: #{deconv_bottleneck_forward.1} parent=0 // pred_region
    _
  $region9: #{deconv_bottleneck_forward.1} parent=0 // pred_fallthru
    _
  // Predicated region
  $region10: #{deconv_bottleneck_forward.1} parent=0 // pred_check
    _
  $region11: #{deconv_bottleneck_forward.1} parent=0 // pred_check_branch
    %21 = sbr.rel (0) target = $region13
  $region12: #{deconv_bottleneck_forward.1} parent=0 // pred_region
    _
  $region13: #{deconv_bottleneck_forward.1} parent=0 // pred_fallthru
    _
  // Predicated region
  $region14: #{deconv_bottleneck_forward.1} parent=0 // pred_check
    _
  $region15: #{deconv_bottleneck_forward.1} parent=0 // pred_check_branch
    %23 = sbr.rel (0) target = $region17
  $region16: #{deconv_bottleneck_forward.1} parent=0 // pred_region
    _
  $region17: #{deconv_bottleneck_forward.1} parent=0 // pred_fallthru
    _
  // Predicated region
  $region18: #{deconv_bottleneck_forward.1} parent=0 // pred_check
    _
  $region19: #{deconv_bottleneck_forward.1} parent=0 // pred_check_branch
    %25 = sbr.rel (0) target = $region21
  $region20: #{deconv_bottleneck_forward.1} parent=0 // pred_region
    _
  $region21: #{deconv_bottleneck_forward.1} parent=0 // pred_fallthru
    _
  // Predicated region
  $region22: #{deconv_bottleneck_forward.1} parent=0 // pred_check
    _
  $region23: #{deconv_bottleneck_forward.1} parent=0 // pred_check_branch
    %27 = sbr.rel (0) target = $region25
  $region24: #{deconv_bottleneck_forward.1} parent=0 // pred_region
    _
  $region25: #{deconv_bottleneck_forward.1} parent=0 // pred_fallthru
    _
  // Predicated region
  $region26: #{deconv_bottleneck_forward.1} parent=0 // pred_check
    _
  $region27: #{deconv_bottleneck_forward.1} parent=0 // pred_check_branch
    %29 = sbr.rel (0) target = $region29
  $region28: #{deconv_bottleneck_forward.1} parent=0 // pred_region
    _
  $region29: #{deconv_bottleneck_forward.1} parent=0 // pred_fallthru
    _
  // Predicated region
  $region30: #{deconv_bottleneck_forward.1} parent=0 // pred_check
    _
  $region31: #{deconv_bottleneck_forward.1} parent=0 // pred_check_branch
    %31 = sbr.rel (0) target = $region33
  $region32: #{deconv_bottleneck_forward.1} parent=0 // pred_region
    _
  $region33: #{deconv_bottleneck_forward.1} parent=0 // pred_fallthru
    _
  // Predicated region
  $region34: #{deconv_bottleneck_forward.1} parent=0 // pred_check
    _
  $region35: #{deconv_bottleneck_forward.1} parent=0 // pred_check_branch
    %33 = sbr.rel (0) target = $region37
  $region36: #{deconv_bottleneck_forward.1} parent=0 // pred_region
    _
  $region37: #{deconv_bottleneck_forward.1} parent=0 // pred_fallthru
    _
  // Predicated region
  $region38: #{deconv_bottleneck_forward.1} parent=0 // pred_check
    _
  $region39: #{deconv_bottleneck_forward.1} parent=0 // pred_check_branch
    %35 = sbr.rel (0) target = $region41
  $region40: #{deconv_bottleneck_forward.1} parent=0 // pred_region
    _
  $region41: #{deconv_bottleneck_forward.1} parent=0 // pred_fallthru
    _
  // Predicated region
  $region42: #{deconv_bottleneck_forward.1} parent=0 // pred_check
    _
  $region43: #{deconv_bottleneck_forward.1} parent=0 // pred_check_branch
    %37 = sbr.rel (0) target = $region45
  $region44: #{deconv_bottleneck_forward.1} parent=0 // pred_region
    _
  $region45: #{deconv_bottleneck_forward.1} parent=0 // pred_fallthru
    _
  %v38 = vld [vmem:[%s0] sm:$0xff]
  %v39 = vld [vmem:[%s0 + $0x8] sm:$0xff]
  %v40 = vld [vmem:[%s0 + $0x10] sm:$0xff]
  %v41 = vld [vmem:[%s0 + $0x18] sm:$0xff]
  %v42 = vld [vmem:[%s2] sm:$0xff]
  %vm43 = vcmask 64512
  %v45 = vsel %vm43, %v42, 0
  %47 = vmatprep.subr.mxu0 %v39
  %48 = vmatpush1.msra.mxu0 %v38
  %49 = vmatprep.subr.mxu0 0.0
  %50 = vmatpush1.msra.mxu0 0.0
  %51 = vmatprep.subr.mxu0 0.0
  %52 = vmatpush1.msra.mxu0 0.0
  %53 = vmatprep.subr.mxu0 0.0
  %54 = vmatpush1.msra.mxu0 0.0
  %55 = vmatprep.subr.mxu0 0.0
  %56 = vmatpush1.msra.mxu0 0.0
  %57 = vmatprep.subr.mxu0 0.0
  %58 = vmatpush1.msra.mxu0 0.0
  %59 = vmatprep.subr.mxu0 0.0
  %60 = vmatpush1.msra.mxu0 0.0
  %61 = vmatprep.subr.mxu0 0.0
  %62 = vmatpush1.msra.mxu0 0.0
  %63 = vmatprep.subr.mxu0 0.0
  %64 = vmatpush1.msra.mxu0 0.0
  %65 = vmatprep.subr.mxu0 0.0
  %66 = vmatpush1.msra.mxu0 0.0
  %67 = vmatprep.subr.mxu0 0.0
  %68 = vmatpush1.msra.mxu0 0.0
  %69 = vmatprep.subr.mxu0 0.0
  %70 = vmatpush1.msra.mxu0 0.0
  %71 = vmatprep.subr.mxu0 0.0
  %72 = vmatpush1.msra.mxu0 0.0
  %73 = vmatprep.subr.mxu0 0.0
  %74 = vmatpush1.msra.mxu0 0.0
  %75 = vmatprep.subr.mxu0 0.0
  %76 = vmatpush1.msra.mxu0 0.0
  %77 = vmatprep.subr.mxu0 0.0
  %78 = vmatpush1.msra.mxu0 0.0
  %79 = vmatprep.subr.mxu0 0.0
  %80 = vmatpush1.msra.mxu0 0.0
  %81 = vmatprep.subr.mxu0 0.0
  %82 = vmatpush1.msra.mxu0 0.0
  %83 = vmatprep.subr.mxu0 0.0
  %84 = vmatpush1.msra.mxu0 0.0
  %85 = vmatprep.subr.mxu0 0.0
  %86 = vmatpush1.msra.mxu0 0.0
  %87 = vmatprep.subr.mxu0 0.0
  %88 = vmatpush1.msra.mxu0 0.0
  %89 = vmatprep.subr.mxu0 0.0
  %90 = vmatpush1.msra.mxu0 0.0
  %91 = vmatprep.subr.mxu0 0.0
  %92 = vmatpush1.msra.mxu0 0.0
  %93 = vmatprep.subr.mxu0 0.0
  %94 = vmatpush1.msra.mxu0 0.0
  %95 = vmatprep.subr.mxu0 0.0
  %96 = vmatpush1.msra.mxu0 0.0
  %97 = vmatprep.subr.mxu0 0.0
  %98 = vmatpush1.msra.mxu0 0.0
  %99 = vmatprep.subr.mxu0 0.0
  %100 = vmatpush1.msra.mxu0 0.0
  %101 = vmatprep.subr.mxu0 0.0
  %102 = vmatpush1.msra.mxu0 0.0
  %103 = vmatprep.subr.mxu0 0.0
  %104 = vmatpush1.msra.mxu0 0.0
  %105 = vmatprep.subr.mxu0 0.0
  %106 = vmatpush1.msra.mxu0 0.0
  %107 = vmatprep.subr.mxu0 0.0
  %108 = vmatpush1.msra.mxu0 0.0
  %109 = vmatprep.subr.mxu0 0.0
  %110 = vmatpush1.msra.mxu0 0.0
  %111 = vmatprep.mubr.f32.mxu0 0.0
  %112 = vmatmul.mubr.f32.gmra.mrb[0].mxu0 %v45
  %v113 = vpop.f32.mrb[0].mxu0
  %v114 = vadd.f32 0.0, %v113
  %v115 = vpop.f32.mrb[0].mxu0
  %v116 = vadd.f32 0.0, %v115
  %117 = vdwg.mxu0
  %118 = vmatprep.subr.mxu0 %v41
  %119 = vmatpush1.msra.mxu0 %v40
  %120 = vmatprep.subr.mxu0 0.0
  %121 = vmatpush1.msra.mxu0 0.0
  %122 = vmatprep.subr.mxu0 0.0
  %123 = vmatpush1.msra.mxu0 0.0
  %124 = vmatprep.subr.mxu0 0.0
  %125 = vmatpush1.msra.mxu0 0.0
  %126 = vmatprep.subr.mxu0 0.0
  %127 = vmatpush1.msra.mxu0 0.0
  %128 = vmatprep.subr.mxu0 0.0
  %129 = vmatpush1.msra.mxu0 0.0
  %130 = vmatprep.subr.mxu0 0.0
  %131 = vmatpush1.msra.mxu0 0.0
  %132 = vmatprep.subr.mxu0 0.0
  %133 = vmatpush1.msra.mxu0 0.0
  %134 = vmatprep.subr.mxu0 0.0
  %135 = vmatpush1.msra.mxu0 0.0
  %136 = vmatprep.subr.mxu0 0.0
  %137 = vmatpush1.msra.mxu0 0.0
  %138 = vmatprep.subr.mxu0 0.0
  %139 = vmatpush1.msra.mxu0 0.0
  %140 = vmatprep.subr.mxu0 0.0
  %141 = vmatpush1.msra.mxu0 0.0
  %142 = vmatprep.subr.mxu0 0.0
  %143 = vmatpush1.msra.mxu0 0.0
  %144 = vmatprep.subr.mxu0 0.0
  %145 = vmatpush1.msra.mxu0 0.0
  %146 = vmatprep.subr.mxu0 0.0
  %147 = vmatpush1.msra.mxu0 0.0
  %148 = vmatprep.subr.mxu0 0.0
  %149 = vmatpush1.msra.mxu0 0.0
  %150 = vmatprep.subr.mxu0 0.0
  %151 = vmatpush1.msra.mxu0 0.0
  %152 = vmatprep.subr.mxu0 0.0
  %153 = vmatpush1.msra.mxu0 0.0
  %154 = vmatprep.subr.mxu0 0.0
  %155 = vmatpush1.msra.mxu0 0.0
  %156 = vmatprep.subr.mxu0 0.0
  %157 = vmatpush1.msra.mxu0 0.0
  %158 = vmatprep.subr.mxu0 0.0
  %159 = vmatpush1.msra.mxu0 0.0
  %160 = vmatprep.subr.mxu0 0.0
  %161 = vmatpush1.msra.mxu0 0.0
  %162 = vmatprep.subr.mxu0 0.0
  %163 = vmatpush1.msra.mxu0 0.0
  %164 = vmatprep.subr.mxu0 0.0
  %165 = vmatpush1.msra.mxu0 0.0
  %166 = vmatprep.subr.mxu0 0.0
  %167 = vmatpush1.msra.mxu0 0.0
  %168 = vmatprep.subr.mxu0 0.0
  %169 = vmatpush1.msra.mxu0 0.0
  %170 = vmatprep.subr.mxu0 0.0
  %171 = vmatpush1.msra.mxu0 0.0
  %172 = vmatprep.subr.mxu0 0.0
  %173 = vmatpush1.msra.mxu0 0.0
  %174 = vmatprep.subr.mxu0 0.0
  %175 = vmatpush1.msra.mxu0 0.0
  %176 = vmatprep.subr.mxu0 0.0
  %177 = vmatpush1.msra.mxu0 0.0
  %178 = vmatprep.subr.mxu0 0.0
  %179 = vmatpush1.msra.mxu0 0.0
  %180 = vmatprep.subr.mxu0 0.0
  %181 = vmatpush1.msra.mxu0 0.0
  %182 = vmatprep.mubr.f32.mxu0 0.0
  %183 = vmatmul.mubr.f32.gmra.mrb[0].mxu0 %v45
  %v184 = vpop.f32.mrb[0].mxu0
  %v185 = vadd.f32 0.0, %v184
  %v186 = vpop.f32.mrb[0].mxu0
  %v187 = vadd.f32 0.0, %v186
  %188 = vdwg.mxu0
  %v189 = vld [vmem:[%s5] sm:$0xff]
  %v190 = vld [vmem:[%s6] sm:$0xff]
  %v191 = vadd.f32 %v114, %v116
  %v192 = vadd.f32 %v191, %v185
  %v193 = vadd.f32 %v192, %v187
  %194 = vadd.xlane.f32.xlu0 %v193
  %v195 = vpop.xlane.xlu0 %194
  %v196 = vmul.f32 %v114, %v114
  %v197 = vmul.f32 %v116, %v116
  %v198 = vmul.f32 %v185, %v185
  %v199 = vmul.f32 %v187, %v187
  %v200 = vadd.f32 %v196, %v197
  %v201 = vadd.f32 %v200, %v198
  %v202 = vadd.f32 %v201, %v199
  %203 = vadd.xlane.f32.xlu0 %v202
  %v204 = vpop.xlane.xlu0 %203
  %v205 = vmul.f32 %v195, 0.001953125
  %v206 = vmul.f32 %v204, 0.001953125
  %v207 = vmul.f32 %v205, %v205
  %v208 = vsub.f32 %v206, %v207
  %v209 = vmax.f32 %v208, 0.0
  %v210 = vadd.f32 %v209, 1e-05
  %v211 = vrsqrt.pop %v210
  %v212 = vmul.f32 %v211, %v189
  %v213 = vmul.f32 %v205, %v212
  %v214 = vsub.f32 %v190, %v213
  %216 = vset.pattern.permute.xlu0 0
  %217 = vperm.xlu0 %216, %v212
  %v218 = vpop.permute.xlu0 %217
  %v220 = vmul.f32 %v114, %v218
  %v221 = vmul.f32 %v116, %v218
  %v222 = vmul.f32 %v185, %v218
  %v223 = vmul.f32 %v187, %v218
  %225 = vset.pattern.permute.xlu0 0
  %226 = vperm.xlu0 %225, %v214
  %v227 = vpop.permute.xlu0 %226
  %v229 = vadd.f32 %v220, %v227
  %v230 = vadd.f32 %v221, %v227
  %v231 = vadd.f32 %v222, %v227
  %v232 = vadd.f32 %v223, %v227
  %v233 = vmax.f32 %v229, 0.0
  %v234 = vmax.f32 %v230, 0.0
  %v235 = vmax.f32 %v231, 0.0
  %v236 = vmax.f32 %v232, 0.0
  %237 = vrot.lane.b32.xlu0 %v233, 17
  %v238 = vpop.permute.xlu0 %237
  %239 = vrot.lane.b32.xlu0 %v234, 17
  %v240 = vpop.permute.xlu0 %239
  %241 = vrot.lane.b32.xlu0 %v235, 17
  %v242 = vpop.permute.xlu0 %241
  %243 = vrot.lane.b32.xlu0 %v236, 17
  %v244 = vpop.permute.xlu0 %243
  %v245 = vlaneseq
  %v246 = vand.u32 %v245, 127
  %vm247 = vcmp.lt.s32.totalorder %v246, 17
  %v248 = vsel %vm247, %v242, %v244
  %v249 = vsel %vm247, %v240, %v242
  %v250 = vsel %vm247, %v238, %v240
  %v251 = vsel %vm247, %v244, %v238
  %v252 = vld [vmem:[%s1] sm:$0xf]
  %v254 = vlaneseq
  %v255 = vshrl.u32 %v254, 7
  %v256 = vsub.s32 0, %v255
  %v257 = vrot.slane %v252, %v256
  %v258 = vlaneseq
  %v259 = vshrl.u32 %v258, 7
  %v260 = vsub.s32 1, %v259
  %v261 = vrot.slane %v252, %v260
  %v262 = vlaneseq
  %v263 = vshrl.u32 %v262, 7
  %v264 = vsub.s32 2, %v263
  %v265 = vrot.slane %v252, %v264
  %v266 = vlaneseq
  %v267 = vshrl.u32 %v266, 7
  %v268 = vsub.s32 3, %v267
  %v269 = vrot.slane %v252, %v268
  %v274 = vmul.f32 %v251, %v257
  %v275 = vmul.f32 %v250, %v261
  %v276 = vmul.f32 %v249, %v265
  %v277 = vmul.f32 %v248, %v269
  %278 = vrot.lane.b32.xlu0 %v233, 16
  %v279 = vpop.permute.xlu0 %278
  %280 = vrot.lane.b32.xlu0 %v234, 16
  %v281 = vpop.permute.xlu0 %280
  %282 = vrot.lane.b32.xlu0 %v235, 16
  %v283 = vpop.permute.xlu0 %282
  %284 = vrot.lane.b32.xlu0 %v236, 16
  %v285 = vpop.permute.xlu0 %284
  %vm286 = vcmp.lt.s32.totalorder %v246, 16
  %v287 = vsel %vm286, %v283, %v285
  %v288 = vsel %vm286, %v281, %v283
  %v289 = vsel %vm286, %v279, %v281
  %v290 = vsel %vm286, %v285, %v279
  %s291 = scalar_lea.vmem %s1, 4
  %v292 = vld [vmem:[%s291] sm:$0xf]
  %v294 = vlaneseq
  %v295 = vshrl.u32 %v294, 7
  %v296 = vsub.s32 0, %v295
  %v297 = vrot.slane %v292, %v296
  %v298 = vlaneseq
  %v299 = vshrl.u32 %v298, 7
  %v300 = vsub.s32 1, %v299
  %v301 = vrot.slane %v292, %v300
  %v302 = vlaneseq
  %v303 = vshrl.u32 %v302, 7
  %v304 = vsub.s32 2, %v303
  %v305 = vrot.slane %v292, %v304
  %v306 = vlaneseq
  %v307 = vshrl.u32 %v306, 7
  %v308 = vsub.s32 3, %v307
  %v309 = vrot.slane %v292, %v308
  %v314 = vmul.f32 %v290, %v297
  %v315 = vmul.f32 %v289, %v301
  %v316 = vmul.f32 %v288, %v305
  %v317 = vmul.f32 %v287, %v309
  %318 = vrot.lane.b32.xlu0 %v233, 15
  %v319 = vpop.permute.xlu0 %318
  %320 = vrot.lane.b32.xlu0 %v234, 15
  %v321 = vpop.permute.xlu0 %320
  %322 = vrot.lane.b32.xlu0 %v235, 15
  %v323 = vpop.permute.xlu0 %322
  %324 = vrot.lane.b32.xlu0 %v236, 15
  %v325 = vpop.permute.xlu0 %324
  %vm326 = vcmp.lt.s32.totalorder %v246, 15
  %v327 = vsel %vm326, %v323, %v325
  %v328 = vsel %vm326, %v321, %v323
  %v329 = vsel %vm326, %v319, %v321
  %v330 = vsel %vm326, %v325, %v319
  %s331 = scalar_lea.vmem %s1, 8
  %v332 = vld [vmem:[%s331] sm:$0xf]
  %v334 = vlaneseq
  %v335 = vshrl.u32 %v334, 7
  %v336 = vsub.s32 0, %v335
  %v337 = vrot.slane %v332, %v336
  %v338 = vlaneseq
  %v339 = vshrl.u32 %v338, 7
  %v340 = vsub.s32 1, %v339
  %v341 = vrot.slane %v332, %v340
  %v342 = vlaneseq
  %v343 = vshrl.u32 %v342, 7
  %v344 = vsub.s32 2, %v343
  %v345 = vrot.slane %v332, %v344
  %v346 = vlaneseq
  %v347 = vshrl.u32 %v346, 7
  %v348 = vsub.s32 3, %v347
  %v349 = vrot.slane %v332, %v348
  %v354 = vmul.f32 %v330, %v337
  %v355 = vmul.f32 %v329, %v341
  %v356 = vmul.f32 %v328, %v345
  %v357 = vmul.f32 %v327, %v349
  %358 = vrot.lane.b32.xlu0 %v233, 1
  %v359 = vpop.permute.xlu0 %358
  %360 = vrot.lane.b32.xlu0 %v234, 1
  %v361 = vpop.permute.xlu0 %360
  %362 = vrot.lane.b32.xlu0 %v235, 1
  %v363 = vpop.permute.xlu0 %362
  %364 = vrot.lane.b32.xlu0 %v236, 1
  %v365 = vpop.permute.xlu0 %364
  %vm366 = vcmp.lt.s32.totalorder %v246, 1
  %v367 = vsel %vm366, %v363, %v365
  %v368 = vsel %vm366, %v361, %v363
  %v369 = vsel %vm366, %v359, %v361
  %v370 = vsel %vm366, %v365, %v359
  %s371 = scalar_lea.vmem %s1, 12
  %v372 = vld [vmem:[%s371] sm:$0xf]
  %v374 = vlaneseq
  %v375 = vshrl.u32 %v374, 7
  %v376 = vsub.s32 0, %v375
  %v377 = vrot.slane %v372, %v376
  %v378 = vlaneseq
  %v379 = vshrl.u32 %v378, 7
  %v380 = vsub.s32 1, %v379
  %v381 = vrot.slane %v372, %v380
  %v382 = vlaneseq
  %v383 = vshrl.u32 %v382, 7
  %v384 = vsub.s32 2, %v383
  %v385 = vrot.slane %v372, %v384
  %v386 = vlaneseq
  %v387 = vshrl.u32 %v386, 7
  %v388 = vsub.s32 3, %v387
  %v389 = vrot.slane %v372, %v388
  %v394 = vmul.f32 %v370, %v377
  %v395 = vmul.f32 %v369, %v381
  %v396 = vmul.f32 %v368, %v385
  %v397 = vmul.f32 %v367, %v389
  %398 = vrot.lane.b32.xlu0 %v233, 127
  %v399 = vpop.permute.xlu0 %398
  %400 = vrot.lane.b32.xlu0 %v234, 127
  %v401 = vpop.permute.xlu0 %400
  %402 = vrot.lane.b32.xlu0 %v235, 127
  %v403 = vpop.permute.xlu0 %402
  %404 = vrot.lane.b32.xlu0 %v236, 127
  %v405 = vpop.permute.xlu0 %404
  %vm406 = vcmp.lt.s32.totalorder %v246, 127
  %v407 = vsel %vm406, %v403, %v405
  %v408 = vsel %vm406, %v401, %v403
  %v409 = vsel %vm406, %v399, %v401
  %v410 = vsel %vm406, %v405, %v399
  %s411 = scalar_lea.vmem %s1, 20
  %v412 = vld [vmem:[%s411] sm:$0xf]
  %v414 = vlaneseq
  %v415 = vshrl.u32 %v414, 7
  %v416 = vsub.s32 0, %v415
  %v417 = vrot.slane %v412, %v416
  %v418 = vlaneseq
  %v419 = vshrl.u32 %v418, 7
  %v420 = vsub.s32 1, %v419
  %v421 = vrot.slane %v412, %v420
  %v422 = vlaneseq
  %v423 = vshrl.u32 %v422, 7
  %v424 = vsub.s32 2, %v423
  %v425 = vrot.slane %v412, %v424
  %v426 = vlaneseq
  %v427 = vshrl.u32 %v426, 7
  %v428 = vsub.s32 3, %v427
  %v429 = vrot.slane %v412, %v428
  %v434 = vmul.f32 %v409, %v417
  %v435 = vmul.f32 %v408, %v421
  %v436 = vmul.f32 %v407, %v425
  %v437 = vmul.f32 %v410, %v429
  %438 = vrot.lane.b32.xlu0 %v233, 113
  %v439 = vpop.permute.xlu0 %438
  %440 = vrot.lane.b32.xlu0 %v234, 113
  %v441 = vpop.permute.xlu0 %440
  %442 = vrot.lane.b32.xlu0 %v235, 113
  %v443 = vpop.permute.xlu0 %442
  %444 = vrot.lane.b32.xlu0 %v236, 113
  %v445 = vpop.permute.xlu0 %444
  %vm446 = vcmp.lt.s32.totalorder %v246, 113
  %v447 = vsel %vm446, %v443, %v445
  %v448 = vsel %vm446, %v441, %v443
  %v449 = vsel %vm446, %v439, %v441
  %v450 = vsel %vm446, %v445, %v439
  %s451 = scalar_lea.vmem %s1, 24
  %v452 = vld [vmem:[%s451] sm:$0xf]
  %v454 = vlaneseq
  %v455 = vshrl.u32 %v454, 7
  %v456 = vsub.s32 0, %v455
  %v457 = vrot.slane %v452, %v456
  %v458 = vlaneseq
  %v459 = vshrl.u32 %v458, 7
  %v460 = vsub.s32 1, %v459
  %v461 = vrot.slane %v452, %v460
  %v462 = vlaneseq
  %v463 = vshrl.u32 %v462, 7
  %v464 = vsub.s32 2, %v463
  %v465 = vrot.slane %v452, %v464
  %v466 = vlaneseq
  %v467 = vshrl.u32 %v466, 7
  %v468 = vsub.s32 3, %v467
  %v469 = vrot.slane %v452, %v468
  %v474 = vmul.f32 %v449, %v457
  %v475 = vmul.f32 %v448, %v461
  %v476 = vmul.f32 %v447, %v465
  %v477 = vmul.f32 %v450, %v469
  %478 = vrot.lane.b32.xlu0 %v233, 112
  %v479 = vpop.permute.xlu0 %478
  %480 = vrot.lane.b32.xlu0 %v234, 112
  %v481 = vpop.permute.xlu0 %480
  %482 = vrot.lane.b32.xlu0 %v235, 112
  %v483 = vpop.permute.xlu0 %482
  %484 = vrot.lane.b32.xlu0 %v236, 112
  %v485 = vpop.permute.xlu0 %484
  %vm486 = vcmp.lt.s32.totalorder %v246, 112
  %v487 = vsel %vm486, %v483, %v485
  %v488 = vsel %vm486, %v481, %v483
  %v489 = vsel %vm486, %v479, %v481
  %v490 = vsel %vm486, %v485, %v479
  %s491 = scalar_lea.vmem %s1, 28
  %v492 = vld [vmem:[%s491] sm:$0xf]
  %v494 = vlaneseq
  %v495 = vshrl.u32 %v494, 7
  %v496 = vsub.s32 0, %v495
  %v497 = vrot.slane %v492, %v496
  %v498 = vlaneseq
  %v499 = vshrl.u32 %v498, 7
  %v500 = vsub.s32 1, %v499
  %v501 = vrot.slane %v492, %v500
  %v502 = vlaneseq
  %v503 = vshrl.u32 %v502, 7
  %v504 = vsub.s32 2, %v503
  %v505 = vrot.slane %v492, %v504
  %v506 = vlaneseq
  %v507 = vshrl.u32 %v506, 7
  %v508 = vsub.s32 3, %v507
  %v509 = vrot.slane %v492, %v508
  %v514 = vmul.f32 %v489, %v497
  %v515 = vmul.f32 %v488, %v501
  %v516 = vmul.f32 %v487, %v505
  %v517 = vmul.f32 %v490, %v509
  %518 = vrot.lane.b32.xlu0 %v233, 111
  %v519 = vpop.permute.xlu0 %518
  %520 = vrot.lane.b32.xlu0 %v234, 111
  %v521 = vpop.permute.xlu0 %520
  %522 = vrot.lane.b32.xlu0 %v235, 111
  %v523 = vpop.permute.xlu0 %522
  %524 = vrot.lane.b32.xlu0 %v236, 111
  %v525 = vpop.permute.xlu0 %524
  %vm526 = vcmp.lt.s32.totalorder %v246, 111
  %v527 = vsel %vm526, %v523, %v525
  %v528 = vsel %vm526, %v521, %v523
  %v529 = vsel %vm526, %v519, %v521
  %v530 = vsel %vm526, %v525, %v519
  %s531 = scalar_lea.vmem %s1, 32
  %v532 = vld [vmem:[%s531] sm:$0xf]
  %v534 = vlaneseq
  %v535 = vshrl.u32 %v534, 7
  %v536 = vsub.s32 0, %v535
  %v537 = vrot.slane %v532, %v536
  %v538 = vlaneseq
  %v539 = vshrl.u32 %v538, 7
  %v540 = vsub.s32 1, %v539
  %v541 = vrot.slane %v532, %v540
  %v542 = vlaneseq
  %v543 = vshrl.u32 %v542, 7
  %v544 = vsub.s32 2, %v543
  %v545 = vrot.slane %v532, %v544
  %v546 = vlaneseq
  %v547 = vshrl.u32 %v546, 7
  %v548 = vsub.s32 3, %v547
  %v549 = vrot.slane %v532, %v548
  %v554 = vmul.f32 %v529, %v537
  %v555 = vmul.f32 %v528, %v541
  %v556 = vmul.f32 %v527, %v545
  %v557 = vmul.f32 %v530, %v549
  %v558 = vld [vmem:[%s3] sm:$0xff]
  %vm559 = vcmask 588800
  %v561 = vsel %vm559, %v558, 0
  %563 = vmatprep.subr.mxu0 %v275
  %564 = vmatpush1.msra.mxu0 %v274
  %565 = vmatprep.subr.mxu0 %v315
  %566 = vmatpush1.msra.mxu0 %v314
  %567 = vmatprep.subr.mxu0 %v355
  %568 = vmatpush1.msra.mxu0 %v354
  %569 = vmatprep.subr.mxu0 %v395
  %570 = vmatpush1.msra.mxu0 %v394
  %571 = vmatprep.subr.mxu0 %v234
  %572 = vmatpush1.msra.mxu0 %v233
  %573 = vmatprep.subr.mxu0 %v435
  %574 = vmatpush1.msra.mxu0 %v434
  %575 = vmatprep.subr.mxu0 %v475
  %576 = vmatpush1.msra.mxu0 %v474
  %577 = vmatprep.subr.mxu0 %v515
  %578 = vmatpush1.msra.mxu0 %v514
  %579 = vmatprep.subr.mxu0 %v555
  %580 = vmatpush1.msra.mxu0 %v554
  %581 = vmatprep.subr.mxu0 0.0
  %582 = vmatpush1.msra.mxu0 0.0
  %583 = vmatprep.subr.mxu0 0.0
  %584 = vmatpush1.msra.mxu0 0.0
  %585 = vmatprep.subr.mxu0 0.0
  %586 = vmatpush1.msra.mxu0 0.0
  %587 = vmatprep.subr.mxu0 0.0
  %588 = vmatpush1.msra.mxu0 0.0
  %589 = vmatprep.subr.mxu0 0.0
  %590 = vmatpush1.msra.mxu0 0.0
  %591 = vmatprep.subr.mxu0 0.0
  %592 = vmatpush1.msra.mxu0 0.0
  %593 = vmatprep.subr.mxu0 0.0
  %594 = vmatpush1.msra.mxu0 0.0
  %595 = vmatprep.subr.mxu0 0.0
  %596 = vmatpush1.msra.mxu0 0.0
  %597 = vmatprep.subr.mxu0 0.0
  %598 = vmatpush1.msra.mxu0 0.0
  %599 = vmatprep.subr.mxu0 0.0
  %600 = vmatpush1.msra.mxu0 0.0
  %601 = vmatprep.subr.mxu0 0.0
  %602 = vmatpush1.msra.mxu0 0.0
  %603 = vmatprep.subr.mxu0 0.0
  %604 = vmatpush1.msra.mxu0 0.0
  %605 = vmatprep.subr.mxu0 0.0
  %606 = vmatpush1.msra.mxu0 0.0
  %607 = vmatprep.subr.mxu0 0.0
  %608 = vmatpush1.msra.mxu0 0.0
  %609 = vmatprep.subr.mxu0 0.0
  %610 = vmatpush1.msra.mxu0 0.0
  %611 = vmatprep.subr.mxu0 0.0
  %612 = vmatpush1.msra.mxu0 0.0
  %613 = vmatprep.subr.mxu0 0.0
  %614 = vmatpush1.msra.mxu0 0.0
  %615 = vmatprep.subr.mxu0 0.0
  %616 = vmatpush1.msra.mxu0 0.0
  %617 = vmatprep.subr.mxu0 0.0
  %618 = vmatpush1.msra.mxu0 0.0
  %619 = vmatprep.subr.mxu0 0.0
  %620 = vmatpush1.msra.mxu0 0.0
  %621 = vmatprep.subr.mxu0 0.0
  %622 = vmatpush1.msra.mxu0 0.0
  %623 = vmatprep.subr.mxu0 0.0
  %624 = vmatpush1.msra.mxu0 0.0
  %625 = vmatprep.subr.mxu0 0.0
  %626 = vmatpush1.msra.mxu0 0.0
  %627 = vmatprep.mubr.f32.mxu0 0.0
  %628 = vmatmul.mubr.f32.gmra.mrb[0].mxu0 %v561
  %v629 = vpop.f32.mrb[0].mxu0
  %v630 = vadd.f32 0.0, %v629
  %v631 = vpop.f32.mrb[0].mxu0
  %v632 = vadd.f32 0.0, %v631
  %633 = vdwg.mxu0
  %634 = vmatprep.subr.mxu0 %v277
  %635 = vmatpush1.msra.mxu0 %v276
  %636 = vmatprep.subr.mxu0 %v317
  %637 = vmatpush1.msra.mxu0 %v316
  %638 = vmatprep.subr.mxu0 %v357
  %639 = vmatpush1.msra.mxu0 %v356
  %640 = vmatprep.subr.mxu0 %v397
  %641 = vmatpush1.msra.mxu0 %v396
  %642 = vmatprep.subr.mxu0 %v236
  %643 = vmatpush1.msra.mxu0 %v235
  %644 = vmatprep.subr.mxu0 %v437
  %645 = vmatpush1.msra.mxu0 %v436
  %646 = vmatprep.subr.mxu0 %v477
  %647 = vmatpush1.msra.mxu0 %v476
  %648 = vmatprep.subr.mxu0 %v517
  %649 = vmatpush1.msra.mxu0 %v516
  %650 = vmatprep.subr.mxu0 %v557
  %651 = vmatpush1.msra.mxu0 %v556
  %652 = vmatprep.subr.mxu0 0.0
  %653 = vmatpush1.msra.mxu0 0.0
  %654 = vmatprep.subr.mxu0 0.0
  %655 = vmatpush1.msra.mxu0 0.0
  %656 = vmatprep.subr.mxu0 0.0
  %657 = vmatpush1.msra.mxu0 0.0
  %658 = vmatprep.subr.mxu0 0.0
  %659 = vmatpush1.msra.mxu0 0.0
  %660 = vmatprep.subr.mxu0 0.0
  %661 = vmatpush1.msra.mxu0 0.0
  %662 = vmatprep.subr.mxu0 0.0
  %663 = vmatpush1.msra.mxu0 0.0
  %664 = vmatprep.subr.mxu0 0.0
  %665 = vmatpush1.msra.mxu0 0.0
  %666 = vmatprep.subr.mxu0 0.0
  %667 = vmatpush1.msra.mxu0 0.0
  %668 = vmatprep.subr.mxu0 0.0
  %669 = vmatpush1.msra.mxu0 0.0
  %670 = vmatprep.subr.mxu0 0.0
  %671 = vmatpush1.msra.mxu0 0.0
  %672 = vmatprep.subr.mxu0 0.0
  %673 = vmatpush1.msra.mxu0 0.0
  %674 = vmatprep.subr.mxu0 0.0
  %675 = vmatpush1.msra.mxu0 0.0
  %676 = vmatprep.subr.mxu0 0.0
  %677 = vmatpush1.msra.mxu0 0.0
  %678 = vmatprep.subr.mxu0 0.0
  %679 = vmatpush1.msra.mxu0 0.0
  %680 = vmatprep.subr.mxu0 0.0
  %681 = vmatpush1.msra.mxu0 0.0
  %682 = vmatprep.subr.mxu0 0.0
  %683 = vmatpush1.msra.mxu0 0.0
  %684 = vmatprep.subr.mxu0 0.0
  %685 = vmatpush1.msra.mxu0 0.0
  %686 = vmatprep.subr.mxu0 0.0
  %687 = vmatpush1.msra.mxu0 0.0
  %688 = vmatprep.subr.mxu0 0.0
  %689 = vmatpush1.msra.mxu0 0.0
  %690 = vmatprep.subr.mxu0 0.0
  %691 = vmatpush1.msra.mxu0 0.0
  %692 = vmatprep.subr.mxu0 0.0
  %693 = vmatpush1.msra.mxu0 0.0
  %694 = vmatprep.subr.mxu0 0.0
  %695 = vmatpush1.msra.mxu0 0.0
  %696 = vmatprep.subr.mxu0 0.0
  %697 = vmatpush1.msra.mxu0 0.0
  %698 = vmatprep.mubr.f32.mxu0 0.0
  %699 = vmatmul.mubr.f32.gmra.mrb[0].mxu0 %v561
  %v700 = vpop.f32.mrb[0].mxu0
  %v701 = vadd.f32 0.0, %v700
  %v702 = vpop.f32.mrb[0].mxu0
  %v703 = vadd.f32 0.0, %v702
  %704 = vdwg.mxu0
  %v705 = vld [vmem:[%s7] sm:$0xff]
  %v706 = vld [vmem:[%s8] sm:$0xff]
  %v707 = vadd.f32 %v630, %v632
  %v708 = vadd.f32 %v707, %v701
  %v709 = vadd.f32 %v708, %v703
  %710 = vadd.xlane.f32.xlu0 %v709
  %v711 = vpop.xlane.xlu0 %710
  %v712 = vmul.f32 %v630, %v630
  %v713 = vmul.f32 %v632, %v632
  %v714 = vmul.f32 %v701, %v701
  %v715 = vmul.f32 %v703, %v703
  %v716 = vadd.f32 %v712, %v713
  %v717 = vadd.f32 %v716, %v714
  %v718 = vadd.f32 %v717, %v715
  %719 = vadd.xlane.f32.xlu0 %v718
  %v720 = vpop.xlane.xlu0 %719
  %v721 = vmul.f32 %v711, 0.001953125
  %v722 = vmul.f32 %v720, 0.001953125
  %v723 = vmul.f32 %v721, %v721
  %v724 = vsub.f32 %v722, %v723
  %v725 = vmax.f32 %v724, 0.0
  %v726 = vadd.f32 %v725, 1e-05
  %v727 = vrsqrt.pop %v726
  %v728 = vmul.f32 %v727, %v705
  %v729 = vmul.f32 %v721, %v728
  %v730 = vsub.f32 %v706, %v729
  %732 = vset.pattern.permute.xlu0 0
  %733 = vperm.xlu0 %732, %v728
  %v734 = vpop.permute.xlu0 %733
  %v736 = vmul.f32 %v630, %v734
  %v737 = vmul.f32 %v632, %v734
  %v738 = vmul.f32 %v701, %v734
  %v739 = vmul.f32 %v703, %v734
  %741 = vset.pattern.permute.xlu0 0
  %742 = vperm.xlu0 %741, %v730
  %v743 = vpop.permute.xlu0 %742
  %v745 = vadd.f32 %v736, %v743
  %v746 = vadd.f32 %v737, %v743
  %v747 = vadd.f32 %v738, %v743
  %v748 = vadd.f32 %v739, %v743
  %v749 = vmax.f32 %v745, 0.0
  %v750 = vmax.f32 %v746, 0.0
  %v751 = vmax.f32 %v747, 0.0
  %v752 = vmax.f32 %v748, 0.0
  %v753 = vld [vmem:[%s4] sm:$0xff]
  %v755 = vsel %vm43, %v753, 0
  %757 = vmatprep.subr.mxu0 %v750
  %758 = vmatpush1.msra.mxu0 %v749
  %759 = vmatprep.subr.mxu0 0.0
  %760 = vmatpush1.msra.mxu0 0.0
  %761 = vmatprep.subr.mxu0 0.0
  %762 = vmatpush1.msra.mxu0 0.0
  %763 = vmatprep.subr.mxu0 0.0
  %764 = vmatpush1.msra.mxu0 0.0
  %765 = vmatprep.subr.mxu0 0.0
  %766 = vmatpush1.msra.mxu0 0.0
  %767 = vmatprep.subr.mxu0 0.0
  %768 = vmatpush1.msra.mxu0 0.0
  %769 = vmatprep.subr.mxu0 0.0
  %770 = vmatpush1.msra.mxu0 0.0
  %771 = vmatprep.subr.mxu0 0.0
  %772 = vmatpush1.msra.mxu0 0.0
  %773 = vmatprep.subr.mxu0 0.0
  %774 = vmatpush1.msra.mxu0 0.0
  %775 = vmatprep.subr.mxu0 0.0
  %776 = vmatpush1.msra.mxu0 0.0
  %777 = vmatprep.subr.mxu0 0.0
  %778 = vmatpush1.msra.mxu0 0.0
  %779 = vmatprep.subr.mxu0 0.0
  %780 = vmatpush1.msra.mxu0 0.0
  %781 = vmatprep.subr.mxu0 0.0
  %782 = vmatpush1.msra.mxu0 0.0
  %783 = vmatprep.subr.mxu0 0.0
  %784 = vmatpush1.msra.mxu0 0.0
  %785 = vmatprep.subr.mxu0 0.0
  %786 = vmatpush1.msra.mxu0 0.0
  %787 = vmatprep.subr.mxu0 0.0
  %788 = vmatpush1.msra.mxu0 0.0
  %789 = vmatprep.subr.mxu0 0.0
  %790 = vmatpush1.msra.mxu0 0.0
  %791 = vmatprep.subr.mxu0 0.0
  %792 = vmatpush1.msra.mxu0 0.0
  %793 = vmatprep.subr.mxu0 0.0
  %794 = vmatpush1.msra.mxu0 0.0
  %795 = vmatprep.subr.mxu0 0.0
  %796 = vmatpush1.msra.mxu0 0.0
  %797 = vmatprep.subr.mxu0 0.0
  %798 = vmatpush1.msra.mxu0 0.0
  %799 = vmatprep.subr.mxu0 0.0
  %800 = vmatpush1.msra.mxu0 0.0
  %801 = vmatprep.subr.mxu0 0.0
  %802 = vmatpush1.msra.mxu0 0.0
  %803 = vmatprep.subr.mxu0 0.0
  %804 = vmatpush1.msra.mxu0 0.0
  %805 = vmatprep.subr.mxu0 0.0
  %806 = vmatpush1.msra.mxu0 0.0
  %807 = vmatprep.subr.mxu0 0.0
  %808 = vmatpush1.msra.mxu0 0.0
  %809 = vmatprep.subr.mxu0 0.0
  %810 = vmatpush1.msra.mxu0 0.0
  %811 = vmatprep.subr.mxu0 0.0
  %812 = vmatpush1.msra.mxu0 0.0
  %813 = vmatprep.subr.mxu0 0.0
  %814 = vmatpush1.msra.mxu0 0.0
  %815 = vmatprep.subr.mxu0 0.0
  %816 = vmatpush1.msra.mxu0 0.0
  %817 = vmatprep.subr.mxu0 0.0
  %818 = vmatpush1.msra.mxu0 0.0
  %819 = vmatprep.subr.mxu0 0.0
  %820 = vmatpush1.msra.mxu0 0.0
  %821 = vmatprep.mubr.f32.mxu0 0.0
  %822 = vmatmul.mubr.f32.gmra.mrb[0].mxu0 %v755
  %v823 = vpop.f32.mrb[0].mxu0
  %v824 = vadd.f32 0.0, %v823
  %v825 = vpop.f32.mrb[0].mxu0
  %v826 = vadd.f32 0.0, %v825
  %827 = vdwg.mxu0
  %828 = vmatprep.subr.mxu0 %v752
  %829 = vmatpush1.msra.mxu0 %v751
  %830 = vmatprep.subr.mxu0 0.0
  %831 = vmatpush1.msra.mxu0 0.0
  %832 = vmatprep.subr.mxu0 0.0
  %833 = vmatpush1.msra.mxu0 0.0
  %834 = vmatprep.subr.mxu0 0.0
  %835 = vmatpush1.msra.mxu0 0.0
  %836 = vmatprep.subr.mxu0 0.0
  %837 = vmatpush1.msra.mxu0 0.0
  %838 = vmatprep.subr.mxu0 0.0
  %839 = vmatpush1.msra.mxu0 0.0
  %840 = vmatprep.subr.mxu0 0.0
  %841 = vmatpush1.msra.mxu0 0.0
  %842 = vmatprep.subr.mxu0 0.0
  %843 = vmatpush1.msra.mxu0 0.0
  %844 = vmatprep.subr.mxu0 0.0
  %845 = vmatpush1.msra.mxu0 0.0
  %846 = vmatprep.subr.mxu0 0.0
  %847 = vmatpush1.msra.mxu0 0.0
  %848 = vmatprep.subr.mxu0 0.0
  %849 = vmatpush1.msra.mxu0 0.0
  %850 = vmatprep.subr.mxu0 0.0
  %851 = vmatpush1.msra.mxu0 0.0
  %852 = vmatprep.subr.mxu0 0.0
  %853 = vmatpush1.msra.mxu0 0.0
  %854 = vmatprep.subr.mxu0 0.0
  %855 = vmatpush1.msra.mxu0 0.0
  %856 = vmatprep.subr.mxu0 0.0
  %857 = vmatpush1.msra.mxu0 0.0
  %858 = vmatprep.subr.mxu0 0.0
  %859 = vmatpush1.msra.mxu0 0.0
  %860 = vmatprep.subr.mxu0 0.0
  %861 = vmatpush1.msra.mxu0 0.0
  %862 = vmatprep.subr.mxu0 0.0
  %863 = vmatpush1.msra.mxu0 0.0
  %864 = vmatprep.subr.mxu0 0.0
  %865 = vmatpush1.msra.mxu0 0.0
  %866 = vmatprep.subr.mxu0 0.0
  %867 = vmatpush1.msra.mxu0 0.0
  %868 = vmatprep.subr.mxu0 0.0
  %869 = vmatpush1.msra.mxu0 0.0
  %870 = vmatprep.subr.mxu0 0.0
  %871 = vmatpush1.msra.mxu0 0.0
  %872 = vmatprep.subr.mxu0 0.0
  %873 = vmatpush1.msra.mxu0 0.0
  %874 = vmatprep.subr.mxu0 0.0
  %875 = vmatpush1.msra.mxu0 0.0
  %876 = vmatprep.subr.mxu0 0.0
  %877 = vmatpush1.msra.mxu0 0.0
  %878 = vmatprep.subr.mxu0 0.0
  %879 = vmatpush1.msra.mxu0 0.0
  %880 = vmatprep.subr.mxu0 0.0
  %881 = vmatpush1.msra.mxu0 0.0
  %882 = vmatprep.subr.mxu0 0.0
  %883 = vmatpush1.msra.mxu0 0.0
  %884 = vmatprep.subr.mxu0 0.0
  %885 = vmatpush1.msra.mxu0 0.0
  %886 = vmatprep.subr.mxu0 0.0
  %887 = vmatpush1.msra.mxu0 0.0
  %888 = vmatprep.subr.mxu0 0.0
  %889 = vmatpush1.msra.mxu0 0.0
  %890 = vmatprep.subr.mxu0 0.0
  %891 = vmatpush1.msra.mxu0 0.0
  %892 = vmatprep.mubr.f32.mxu0 0.0
  %893 = vmatmul.mubr.f32.gmra.mrb[0].mxu0 %v755
  %v894 = vpop.f32.mrb[0].mxu0
  %v895 = vadd.f32 0.0, %v894
  %v896 = vpop.f32.mrb[0].mxu0
  %v897 = vadd.f32 0.0, %v896
  %898 = vdwg.mxu0
  %v899 = vld [vmem:[%s9] sm:$0xff]
  %v900 = vld [vmem:[%s10] sm:$0xff]
  %v901 = vadd.f32 %v824, %v826
  %v902 = vadd.f32 %v901, %v895
  %v903 = vadd.f32 %v902, %v897
  %904 = vadd.xlane.f32.xlu0 %v903
  %v905 = vpop.xlane.xlu0 %904
  %v906 = vmul.f32 %v824, %v824
  %v907 = vmul.f32 %v826, %v826
  %v908 = vmul.f32 %v895, %v895
  %v909 = vmul.f32 %v897, %v897
  %v910 = vadd.f32 %v906, %v907
  %v911 = vadd.f32 %v910, %v908
  %v912 = vadd.f32 %v911, %v909
  %913 = vadd.xlane.f32.xlu0 %v912
  %v914 = vpop.xlane.xlu0 %913
  %v915 = vmul.f32 %v905, 0.001953125
  %v916 = vmul.f32 %v914, 0.001953125
  %v917 = vmul.f32 %v915, %v915
  %v918 = vsub.f32 %v916, %v917
  %v919 = vmax.f32 %v918, 0.0
  %v920 = vadd.f32 %v919, 1e-05
  %v921 = vrsqrt.pop %v920
  %v922 = vmul.f32 %v921, %v899
  %v923 = vmul.f32 %v915, %v922
  %v924 = vsub.f32 %v900, %v923
  %926 = vset.pattern.permute.xlu0 0
  %927 = vperm.xlu0 %926, %v922
  %v928 = vpop.permute.xlu0 %927
  %v930 = vmul.f32 %v824, %v928
  %v931 = vmul.f32 %v826, %v928
  %v932 = vmul.f32 %v895, %v928
  %v933 = vmul.f32 %v897, %v928
  %935 = vset.pattern.permute.xlu0 0
  %936 = vperm.xlu0 %935, %v924
  %v937 = vpop.permute.xlu0 %936
  %v939 = vadd.f32 %v930, %v937
  %v940 = vadd.f32 %v931, %v937
  %v941 = vadd.f32 %v932, %v937
  %v942 = vadd.f32 %v933, %v937
  %v943 = vmax.f32 %v939, 0.0
  %v944 = vmax.f32 %v940, 0.0
  %v945 = vmax.f32 %v941, 0.0
  %v946 = vmax.f32 %v942, 0.0
  %v947 = vadd.f32 %v943, %v38
  %v948 = vadd.f32 %v944, %v39
  %v949 = vadd.f32 %v945, %v40
  %v950 = vadd.f32 %v946, %v41
  %v951 = vmax.f32 %v947, 0.0
  %v952 = vmax.f32 %v948, 0.0
  %v953 = vmax.f32 %v949, 0.0
  %v954 = vmax.f32 %v950, 0.0
  %955 = vst [vmem:[%s11] sm:$0xff] %v951
  %956 = vst [vmem:[%s11 + $0x8] sm:$0xff] %v952
  %957 = vst [vmem:[%s11 + $0x10] sm:$0xff] %v953
  %958 = vst [vmem:[%s11 + $0x18] sm:$0xff] %v954
  // Predicated region
  $region46: #{deconv_bottleneck_forward.1} parent=0 // pred_check
    _
  $region47: #{deconv_bottleneck_forward.1} parent=0 // pred_check_branch
    %960 = sbr.rel (0) target = $region49
  $region48: #{deconv_bottleneck_forward.1} parent=0 // pred_region
    _
  $region49: #{deconv_bottleneck_forward.1} parent=0 // pred_fallthru
    _
  // Predicated region
  $region50: #{deconv_bottleneck_forward.1} parent=0 // pred_check
    _
  $region51: #{deconv_bottleneck_forward.1} parent=0 // pred_check_branch
    %962 = sbr.rel (0) target = $region53
  $region52: #{deconv_bottleneck_forward.1} parent=0 // pred_region
    _
  $region53: #{deconv_bottleneck_forward.1} parent=0 // pred_fallthru
    _

</llo_original>
